<compile_context>
chip_gen: v5e
topology: v5e:2x2
jax: 0.10.0
libtpu: 0.0.40
codegen_flags: <defaults>
</compile_context>

<pallas_src>
import jax
import jax.numpy as jnp
from jax import lax
from jax.experimental import pallas as pl
from jax.experimental.pallas import tpu as pltpu


def _make_kernel(use_precomputed_xlogx):
    """Kernel factory; the xlogx choice is a static (trace-time) switch."""

    def kernel(tc_ref, lg_ref, side_ref, part_ref):
        tc = tc_ref[...].astype(jnp.float32)     # (TB, Lp) true counts
        lg = lg_ref[...].astype(jnp.float32)     # (TB, Lp) logits
        side = side_ref[...]                     # (TB, 8)  packed side data (f32)
        tp = side[:, 0:1]                        # tot_pred
        sk = side[:, 1:2]                        # idx_skip mask

        # Row reductions (per example) -- the only (TB, Lp) work done.
        counts = jnp.sum(tc, axis=1, keepdims=True)                      # (TB, 1)
        m = jnp.max(lg, axis=1, keepdims=True)                           # (TB, 1)
        lse = jnp.log(jnp.sum(jnp.exp(lg - m), axis=1, keepdims=True))   # logsumexp - m

        if use_precomputed_xlogx:
            # Data-only term sum(tc*log tc) was precomputed in the wrapper.
            num = side[:, 2:3] - jnp.sum(tc * lg, axis=1, keepdims=True)
        else:
            # Folded: sum_l [xlogy(tc, tc) - tc*lg] = sum_l tc*(log(max(tc,tiny)) - lg)
            # (exactly 0 where tc == 0; tiny keeps log finite, no cmp/select).
            num = jnp.sum(tc * (jnp.log(jnp.maximum(tc, 1e-30)) - lg),
                          axis=1, keepdims=True)

        # Per-row KLD (counts > 0), 0 otherwise; all log/reciprocal inputs guarded.
        has = counts > 0.0
        safe_counts = jnp.where(has, counts, 1.0)
        inv_c = jnp.where(has, pl.reciprocal(safe_counts, approx=False), 0.0)
        kld_row = jnp.where(has,
                            num * inv_c - jnp.log(safe_counts) + m + lse,
                            0.0)                                          # (TB, 1)

        mse_row = (jnp.log(counts + 1.0) - tp) ** 2                       # (TB, 1)

        kld_p = jnp.sum(kld_row * sk)
        mse_p = jnp.sum(mse_row * sk)

        # Lane-dense (1, 8, 128) output slab: [0,0,0] = KLD partial,
        # [0,0,1] = MSE partial, everything else zero.
        sub = lax.broadcasted_iota(jnp.int32, part_ref.shape, 1)
        lane = lax.broadcasted_iota(jnp.int32, part_ref.shape, 2)
        part_ref[...] = (jnp.where((sub == 0) & (lane == 0), kld_p, 0.0)
                         + jnp.where((sub == 0) & (lane == 1), mse_p, 0.0))

    return kernel


def atac_loss_kld(true_counts, logits, tot_pred, idx_skip,
                  weight_mse=1.0, weight_kld=1.0,
                  xlogx_sum=None, block_b=None, vmem_limit_bytes=None):
    """Pallas implementation of ATACloss_KLD.forward.

    true_counts: (B, L)  (any float dtype; f32 conversion happens in-VMEM)
    logits:      (B, L)
    tot_pred:    (B,) or (B, 1)
    idx_skip:    (B,)
    xlogx_sum:   optional (B,) precomputed sum_l xlogy(tc, tc)  (data-only term)
    Returns (loss, KLD, MSE) float32 scalars.
    """
    B, L = true_counts.shape

    # ---- pad L to a multiple of 128 (lane-dense tiles) -----------------------
    Lp = -(-L // 128) * 128
    if Lp != L:
        true_counts = jnp.pad(true_counts, ((0, 0), (0, Lp - L)))
        # logits MUST be padded with a large negative value (not 0) so that
        # max / logsumexp are unchanged; tc padded with 0 zeroes all other terms.
        logits = jnp.pad(logits, ((0, 0), (0, Lp - L)), constant_values=-1e30)

    # ---- pack side inputs into one (B, 8) f32 array (single tiny DMA stream) -
    tp = jnp.reshape(tot_pred, (B,)).astype(jnp.float32)
    sk = jnp.reshape(idx_skip, (B,)).astype(jnp.float32)
    use_pre = xlogx_sum is not None
    side_cols = [tp, sk]
    if use_pre:
        side_cols.append(jnp.reshape(xlogx_sum, (B,)).astype(jnp.float32))
    side = jnp.stack(side_cols, axis=1)
    side = jnp.pad(side, ((0, 0), (0, 8 - side.shape[1])))          # (B, 8)

    # ---- per-generation VMEM budget ------------------------------------------
    try:
        vmem_cap = int(pltpu.get_tpu_info().vmem_capacity_bytes)
    except Exception:
        vmem_cap = 64 * 1024 * 1024                   # conservative (v7x-sized)
    if vmem_cap >= 100 * 1024 * 1024:                  # v5e / v6e: 128 MiB VMEM
        input_budget = 28 * 1024 * 1024
        default_limit = 96 * 1024 * 1024
    else:                                              # v7x: 64 MiB VMEM
        input_budget = 20 * 1024 * 1024
        default_limit = 44 * 1024 * 1024
    if vmem_limit_bytes is None:
        vmem_limit_bytes = default_limit

    # Dtype-aware bytes per batch row: double-buffered input streams + side
    # array, plus headroom for single-buffered f32 upcast / elementwise temps.
    in_itm = true_counts.dtype.itemsize + logits.dtype.itemsize
    per_row = 2 * in_itm * Lp + 2 * 8 * 4 + 3 * 4 * Lp

    b8 = -(-B // 8) * 8
    if block_b is None:
        tb = max(8, (input_budget // per_row) // 8 * 8)
        # Ensure grid >= 2 when B allows it so v7x megacore gets both TCs busy.
        tb = min(tb, max(8, -(-b8 // 16) * 8))
    else:
        tb = max(8, (int(block_b) // 8) * 8)
    tb = int(min(tb, b8))

    bp = -(-B // tb) * tb                              # padded batch
    grid = bp // tb

    pad = bp - B
    if pad:
        # Padded rows: tc == 0 (counts == 0) and sk == 0 -> contribute exactly 0.
        true_counts = jnp.pad(true_counts, ((0, pad), (0, 0)))
        logits = jnp.pad(logits, ((0, pad), (0, 0)))
        side = jnp.pad(side, ((0, pad), (0, 0)))

    in_bytes = (true_counts.size * true_counts.dtype.itemsize
                + logits.size * logits.dtype.itemsize
                + side.size * 4)
    cost = pl.CostEstimate(
        flops=int(9 * bp * Lp),
        transcendentals=int(2 * bp * Lp),
        bytes_accessed=int(in_bytes) + grid * 8 * 128 * 4,
    )

    partials = pl.pallas_call(
        _make_kernel(use_pre),
        out_shape=jax.ShapeDtypeStruct((grid, 8, 128), jnp.float32),
        grid=(grid,),
        in_specs=[
            pl.BlockSpec((tb, Lp), lambda i: (i, 0)),
            pl.BlockSpec((tb, Lp), lambda i: (i, 0)),
            pl.BlockSpec((tb, 8), lambda i: (i, 0)),
        ],
        out_specs=pl.BlockSpec((1, 8, 128), lambda i: (i, 0, 0)),
        compiler_params=pltpu.CompilerParams(
            dimension_semantics=("parallel",),
            vmem_limit_bytes=int(vmem_limit_bytes)),
        cost_estimate=cost,
    )(true_counts, logits, side)

    kld = jnp.sum(partials[:, 0, 0])
    mse = jnp.sum(partials[:, 0, 1])
    loss = jnp.float32(weight_mse) * mse + jnp.float32(weight_kld) * kld
    return loss, kld, mse


def _reference(true_counts, logits, tot_pred, idx_skip, w_mse=1.0, w_kld=1.0):
    """Plain-JAX reference mirroring the PyTorch module."""
    counts = jnp.sum(true_counts, axis=1)
    prob = true_counts / counts[:, None]
    prob = jnp.where(jnp.isnan(prob), 0.0, prob)
    logsm = jax.nn.log_softmax(logits, axis=1)
    xlogy = jnp.where(prob > 0.0, prob * jnp.log(prob), 0.0)
    kld_elem = xlogy - prob * logsm
    kld = jnp.sum(kld_elem * idx_skip[:, None])
    mse_elem = (jnp.log(counts + 1.0) - jnp.reshape(tot_pred, (-1,))) ** 2
    mse = jnp.sum(mse_elem * idx_skip)
    loss = w_mse * mse + w_kld * kld
    return loss, kld, mse


if __name__ == "__main__":
    key = jax.random.PRNGKey(0)
    k1, k2, k3, k4 = jax.random.split(key, 4)

    # Small, deterministic example: B not a multiple of 8 and L not a multiple
    # of 128 to exercise both padding paths; one all-zero row hits counts == 0.
    B, L = 10, 200
    true_counts = jnp.floor(jax.random.uniform(k1, (B, L), jnp.float32, 0.0, 10.0))
    true_counts = true_counts.at[0].set(0.0)
    logits = jax.random.normal(k2, (B, L), jnp.float32)
    tot_pred = jax.random.normal(k3, (B, 1), jnp.float32)
    idx_skip = (jax.random.uniform(k4, (B,), jnp.float32) > 0.25).astype(jnp.float32)

    loss, kld, mse = atac_loss_kld(true_counts, logits, tot_pred, idx_skip,
                                   weight_mse=1.0, weight_kld=1.0)
    jax.block_until_ready((loss, kld, mse))

    loss_r, kld_r, mse_r = _reference(true_counts, logits, tot_pred, idx_skip)
    assert jnp.allclose(kld, kld_r, rtol=1e-4, atol=1e-3), (kld, kld_r)
    assert jnp.allclose(mse, mse_r, rtol=1e-4, atol=1e-3), (mse, mse_r)
    assert jnp.allclose(loss, loss_r, rtol=1e-4, atol=1e-3), (loss, loss_r)

    # Optional precomputed-xlogx path (data-only term hoisted out of the kernel).
    xlogx = jnp.sum(jnp.where(true_counts > 0.0,
                              true_counts * jnp.log(true_counts), 0.0), axis=1)
    loss2, kld2, mse2 = atac_loss_kld(true_counts, logits, tot_pred, idx_skip,
                                      xlogx_sum=xlogx)
    jax.block_until_ready((loss2, kld2, mse2))
    assert jnp.allclose(kld2, kld_r, rtol=1e-4, atol=1e-3), (kld2, kld_r)
    assert jnp.allclose(mse2, mse_r, rtol=1e-4, atol=1e-3), (mse2, mse_r)
    assert jnp.allclose(loss2, loss_r, rtol=1e-4, atol=1e-3), (loss2, loss_r)

    print("KERNEL_OK")
</pallas_src>

<mosaic_0001>
module attributes {stable_mosaic.version = 11 : i64} {
  func.func @kernel(%arg0: i32, %arg1: memref<8x256xf32, #tpu.memory_space<vmem>>, %arg2: memref<8x256xf32, #tpu.memory_space<vmem>>, %arg3: memref<8x8xf32, #tpu.memory_space<vmem>>, %arg4: memref<1x8x128xf32, #tpu.memory_space<vmem>>) attributes {dimension_semantics = [#tpu.dimension_semantics<parallel>], iteration_bounds = array<i64: 2>, scalar_prefetch = 0 : i64, scratch_operands = 0 : i64, tpu.core_type = #tpu.core_type<tc>, window_params = [{transform_indices = @transform_0, window_bounds = array<i64: 8, 256>}, {transform_indices = @transform_1, window_bounds = array<i64: 8, 256>}, {transform_indices = @transform_2, window_bounds = array<i64: 8, 8>}, {transform_indices = @transform_3, window_bounds = array<i64: 1, 8, 128>}]} {
    %c0 = arith.constant 0 : index
    %c0_0 = arith.constant 0 : index
    %0 = vector.load %arg1[%c0, %c0_0] : memref<8x256xf32, #tpu.memory_space<vmem>>, vector<8x256xf32>
    %c0_1 = arith.constant 0 : index
    %c0_2 = arith.constant 0 : index
    %1 = vector.load %arg2[%c0_1, %c0_2] : memref<8x256xf32, #tpu.memory_space<vmem>>, vector<8x256xf32>
    %c0_3 = arith.constant 0 : index
    %c0_4 = arith.constant 0 : index
    %2 = vector.load %arg3[%c0_3, %c0_4] : memref<8x8xf32, #tpu.memory_space<vmem>>, vector<8x8xf32>
    %3 = vector.extract_strided_slice %2 {offsets = [0, 0], sizes = [8, 1], strides = [1, 1]} : vector<8x8xf32> to vector<8x1xf32>
    %4 = vector.extract_strided_slice %2 {offsets = [0, 1], sizes = [8, 1], strides = [1, 1]} : vector<8x8xf32> to vector<8x1xf32>
    %cst = arith.constant dense<0.000000e+00> : vector<8xf32>
    %5 = vector.multi_reduction <add>, %0, %cst [1] : vector<8x256xf32> to vector<8xf32>
    %6 = vector.shape_cast %5 : vector<8xf32> to vector<8x1xf32>
    %cst_5 = arith.constant dense<0xFF800000> : vector<8xf32>
    %7 = vector.multi_reduction <maximumf>, %1, %cst_5 [1] : vector<8x256xf32> to vector<8xf32>
    %8 = vector.shape_cast %7 : vector<8xf32> to vector<8x1xf32>
    %9 = vector.broadcast %8 : vector<8x1xf32> to vector<8x256xf32>
    %10 = arith.subf %1, %9 : vector<8x256xf32>
    %11 = math.exp %10 : vector<8x256xf32>
    %cst_6 = arith.constant dense<0.000000e+00> : vector<8xf32>
    %12 = vector.multi_reduction <add>, %11, %cst_6 [1] : vector<8x256xf32> to vector<8xf32>
    %13 = vector.shape_cast %12 : vector<8xf32> to vector<8x1xf32>
    %14 = math.log %13 : vector<8x1xf32>
    %cst_7 = arith.constant 1.000000e-30 : f32
    %15 = vector.broadcast %cst_7 : f32 to vector<8x256xf32>
    %16 = arith.maximumf %0, %15 : vector<8x256xf32>
    %17 = math.log %16 : vector<8x256xf32>
    %18 = arith.subf %17, %1 : vector<8x256xf32>
    %19 = arith.mulf %0, %18 : vector<8x256xf32>
    %cst_8 = arith.constant dense<0.000000e+00> : vector<8xf32>
    %20 = vector.multi_reduction <add>, %19, %cst_8 [1] : vector<8x256xf32> to vector<8xf32>
    %21 = vector.shape_cast %20 : vector<8xf32> to vector<8x1xf32>
    %cst_9 = arith.constant 0.000000e+00 : f32
    %22 = vector.broadcast %cst_9 : f32 to vector<8x1xf32>
    %23 = arith.cmpf ogt, %6, %22 : vector<8x1xf32>
    %cst_10 = arith.constant 1.000000e+00 : f32
    %24 = vector.broadcast %cst_10 : f32 to vector<8x1xf32>
    %25 = arith.select %23, %6, %24 : vector<8x1xi1>, vector<8x1xf32>
    %26 = tpu.reciprocal %25 : vector<8x1xf32> -> vector<8x1xf32>
    %cst_11 = arith.constant 0.000000e+00 : f32
    %27 = vector.broadcast %cst_11 : f32 to vector<8x1xf32>
    %28 = arith.select %23, %26, %27 : vector<8x1xi1>, vector<8x1xf32>
    %29 = arith.mulf %21, %28 : vector<8x1xf32>
    %30 = math.log %25 : vector<8x1xf32>
    %31 = arith.subf %29, %30 : vector<8x1xf32>
    %32 = arith.addf %31, %8 : vector<8x1xf32>
    %33 = arith.addf %32, %14 : vector<8x1xf32>
    %cst_12 = arith.constant 0.000000e+00 : f32
    %34 = vector.broadcast %cst_12 : f32 to vector<8x1xf32>
    %35 = arith.select %23, %33, %34 : vector<8x1xi1>, vector<8x1xf32>
    %cst_13 = arith.constant 1.000000e+00 : f32
    %36 = vector.broadcast %cst_13 : f32 to vector<8x1xf32>
    %37 = arith.addf %6, %36 : vector<8x1xf32>
    %38 = math.log %37 : vector<8x1xf32>
    %39 = arith.subf %38, %3 : vector<8x1xf32>
    %40 = arith.mulf %39, %39 : vector<8x1xf32>
    %41 = arith.mulf %35, %4 : vector<8x1xf32>
    %42 = vector.shape_cast %41 : vector<8x1xf32> to vector<1x8x1xf32>
    %cst_14 = arith.constant dense<0.000000e+00> : vector<1xf32>
    %43 = vector.multi_reduction <add>, %42, %cst_14 [1, 2] : vector<1x8x1xf32> to vector<1xf32>
    %44 = vector.shape_cast %43 : vector<1xf32> to vector<1x1x1xf32>
    %45 = vector.extract %44[0, 0, 0] : f32 from vector<1x1x1xf32>
    %46 = arith.mulf %40, %4 : vector<8x1xf32>
    %47 = vector.shape_cast %46 : vector<8x1xf32> to vector<1x8x1xf32>
    %cst_15 = arith.constant dense<0.000000e+00> : vector<1xf32>
    %48 = vector.multi_reduction <add>, %47, %cst_15 [1, 2] : vector<1x8x1xf32> to vector<1xf32>
    %49 = vector.shape_cast %48 : vector<1xf32> to vector<1x1x1xf32>
    %50 = vector.extract %49[0, 0, 0] : f32 from vector<1x1x1xf32>
    %51 = tpu.iota {dimensions = array<i32: 1>} : vector<1x8x128xi32>
    %52 = tpu.iota {dimensions = array<i32: 2>} : vector<1x8x128xi32>
    %c0_i32 = arith.constant 0 : i32
    %53 = vector.broadcast %c0_i32 : i32 to vector<1x8x128xi32>
    %54 = arith.cmpi eq, %51, %53 : vector<1x8x128xi32>
    %c0_i32_16 = arith.constant 0 : i32
    %55 = vector.broadcast %c0_i32_16 : i32 to vector<1x8x128xi32>
    %56 = arith.cmpi eq, %52, %55 : vector<1x8x128xi32>
    %57 = arith.andi %54, %56 : vector<1x8x128xi1>
    %cst_17 = arith.constant 0.000000e+00 : f32
    %58 = vector.broadcast %45 : f32 to vector<1x8x128xf32>
    %59 = vector.broadcast %cst_17 : f32 to vector<1x8x128xf32>
    %60 = arith.select %57, %58, %59 : vector<1x8x128xi1>, vector<1x8x128xf32>
    %c0_i32_18 = arith.constant 0 : i32
    %61 = vector.broadcast %c0_i32_18 : i32 to vector<1x8x128xi32>
    %62 = arith.cmpi eq, %51, %61 : vector<1x8x128xi32>
    %c1_i32 = arith.constant 1 : i32
    %63 = vector.broadcast %c1_i32 : i32 to vector<1x8x128xi32>
    %64 = arith.cmpi eq, %52, %63 : vector<1x8x128xi32>
    %65 = arith.andi %62, %64 : vector<1x8x128xi1>
    %cst_19 = arith.constant 0.000000e+00 : f32
    %66 = vector.broadcast %50 : f32 to vector<1x8x128xf32>
    %67 = vector.broadcast %cst_19 : f32 to vector<1x8x128xf32>
    %68 = arith.select %65, %66, %67 : vector<1x8x128xi1>, vector<1x8x128xf32>
    %69 = arith.addf %60, %68 : vector<1x8x128xf32>
    %c0_20 = arith.constant 0 : index
    %c0_21 = arith.constant 0 : index
    %c0_22 = arith.constant 0 : index
    %70 = vector.load %arg4[%c0_20, %c0_21, %c0_22] : memref<1x8x128xf32, #tpu.memory_space<vmem>>, vector<1x8x128xf32>
    tpu.vector_store %arg4[%c0_20, %c0_21, %c0_22], %69 {strides = array<i32>} : memref<1x8x128xf32, #tpu.memory_space<vmem>>, vector<1x8x128xf32>,
    return
  }
  func.func @transform_0(%arg0: i32) -> (i32, i32) {
    %c0_i32 = arith.constant 0 : i32
    %c0_i32_0 = arith.constant 0 : i32
    return %arg0, %c0_i32 : i32, i32
  }
  func.func @transform_1(%arg0: i32) -> (i32, i32) {
    %c0_i32 = arith.constant 0 : i32
    %c0_i32_0 = arith.constant 0 : i32
    return %arg0, %c0_i32 : i32, i32
  }
  func.func @transform_2(%arg0: i32) -> (i32, i32) {
    %c0_i32 = arith.constant 0 : i32
    %c0_i32_0 = arith.constant 0 : i32
    return %arg0, %c0_i32 : i32, i32
  }
  func.func @transform_3(%arg0: i32) -> (i32, i32, i32) {
    %c0_i32 = arith.constant 0 : i32
    %c0_i32_0 = arith.constant 0 : i32
    %c0_i32_1 = arith.constant 0 : i32
    return %arg0, %c0_i32, %c0_i32_0 : i32, i32, i32
  }
}

</mosaic_0001>

<llo_original>
// kernel: tpu_custom_call.1
$region0: #{tpu_custom_call.1}
  #allocation0 [shape = 'u32[]', space=smem, size = 0x4, offset = 0x4, fixed_abs, tag = 'smem constant byte address 0x4 - core index']
  #allocation1 [shape = 'u32[72,128]{1,0:T(1,128)}', space=vmem, size = 0x9000, scoped, tag = 'internal scratch']
  %s0 = inlined_call_operand.hbm [shape: f32[16,256], index: 0, kind: input, shape index: {}]
  %s1 = inlined_call_operand.hbm [shape: f32[16,256], index: 1, kind: input, shape index: {}]
  %s2 = inlined_call_operand.vmem [shape: f32[16,8], index: 2, kind: input, shape index: {}]
  %s3 = inlined_call_operand.hbm [shape: f32[2,8,128], index: 3, kind: output, shape index: {}]
  %s4 = sld [smem:[#allocation0]]
  $region53: #{tpu_custom_call.1} parent=0
    _
  %s6 = ssub.s32 1, %s4
  %s7 = scalar_select 0, %s6, %s4
  $region1: #{tpu_custom_call.1} parent=0
    #allocation2 [shape = 'u8[16384]{0}', space=vmem, size = 0x4000, scoped, tag = 'input window, operand 0']
    #allocation3 [shape = 's32[2]{0}', space=sflag, size = 0x8, scoped, tag = 'scoped memory for tpu_custom_call.1']
    #allocation4 [shape = 's32[2]{0}', space=sflag, size = 0x8, scoped, tag = 'scoped memory for tpu_custom_call.1']
    #allocation5 [shape = 'u8[16384]{0}', space=vmem, size = 0x4000, scoped, tag = 'input window, operand 1']
    #allocation6 [shape = 's32[2]{0}', space=sflag, size = 0x8, scoped, tag = 'scoped memory for tpu_custom_call.1']
    #allocation7 [shape = 'u8[8192]{0}', space=vmem, size = 0x2000, scoped, tag = 'output window, operand 0']
    %8 = vsyncpa [#allocation3], 0
    %s9 = scalar_lea.sflag [#allocation3], 1
    %10 = vsyncpa %s9, 0
    %11 = vsyncpa [#allocation6], 0
    %s12 = scalar_lea.sflag [#allocation6], 1
    %13 = vsyncpa %s12, 0
    %14 = vsyncpa [#allocation4], 0
    %s15 = scalar_lea.sflag [#allocation4], 1
    %16 = vsyncpa %s15, 0
    loop: start=0, step=1, limit=4
    $region2: #{tpu_custom_call.1} parent=1 // loop_pre_header
      _
    $region3: #{tpu_custom_call.1} parent=1 // loop_header
      %s18 = sphi 0, %s22
      %p19 = scmp.ge.s32.totalorder %s18, 4
      %s28 = sphi 0, %s30
      %s31 = sphi 0, %s28
      %s32 = sphi 0, %s31
      %s48 = sphi 0, %s32
      %s54 = sphi 0, %s56
      %s57 = sphi 0, %s54
      %s58 = sphi 0, %s57
      %s74 = sphi 0, %s58
      %s80 = sphi 0, %s82
      %s83 = sphi 0, %s80
      %s84 = sphi 0, %s83
      %s100 = sphi 0, %s84
      %s106 = sphi 0, %s108
      %s109 = sphi 0, %s106
      %s110 = sphi 0, %s109
      %s126 = sphi 0, %s110
    $region4: #{tpu_custom_call.1} parent=1 // loop_header_branch
      %21 = sbr.rel (%p19) target = $region8
    $region5: #{tpu_custom_call.1} parent=1 // loop_body
      %s23 = ssub.s32 %s18, 1
      %s24 = ssub.s32 %s18, 2
      %s25 = sadd.s32 %s18, 1
      %s26 = ssub.s32 %s18, %s25
      %p27 = scmp.eq.s32.totalorder %s26, 0
      %s29 = sadd.s32 %s28, 1
      %s30 = scalar_select %p27, %s28, %s29
      %p33 = pneg %p27
      %p34 = scmp.eq.s32.totalorder %s18, 1
      %p35 = por %p33, %p34
      %p36 = scmp.ne.s32.totalorder %s28, %s31
      %p37 = scmp.eq.s32.totalorder %s18, 0
      %p38 = por %p36, %p37
      %p39 = scmp.ne.s32.totalorder %s28, %s31
      %p40 = scmp.eq.s32.totalorder %s23, 1
      %p41 = por %p39, %p40
      %p42 = scmp.ne.s32.totalorder %s31, %s32
      %p43 = scmp.eq.s32.totalorder %s23, 0
      %p44 = por %p42, %p43
      %p45 = scmp.ne.s32.totalorder %s31, %s32
      %p46 = scmp.eq.s32.totalorder %s24, 1
      %p47 = por %p45, %p46
      %p49 = scmp.ne.s32.totalorder %s32, %s48
      %p50 = scmp.eq.s32.totalorder %s24, 0
      %p51 = por %p49, %p50
      %s52 = ssub.s32 %s18, %s25
      %p53 = scmp.eq.s32.totalorder %s52, 0
      %s55 = sadd.s32 %s54, 1
      %s56 = scalar_select %p53, %s54, %s55
      %p59 = pneg %p53
      %p60 = scmp.eq.s32.totalorder %s18, 1
      %p61 = por %p59, %p60
      %p62 = scmp.ne.s32.totalorder %s54, %s57
      %p63 = scmp.eq.s32.totalorder %s18, 0
      %p64 = por %p62, %p63
      %p65 = scmp.ne.s32.totalorder %s54, %s57
      %p66 = scmp.eq.s32.totalorder %s23, 1
      %p67 = por %p65, %p66
      %p68 = scmp.ne.s32.totalorder %s57, %s58
      %p69 = scmp.eq.s32.totalorder %s23, 0
      %p70 = por %p68, %p69
      %p71 = scmp.ne.s32.totalorder %s57, %s58
      %p72 = scmp.eq.s32.totalorder %s24, 1
      %p73 = por %p71, %p72
      %p75 = scmp.ne.s32.totalorder %s58, %s74
      %p76 = scmp.eq.s32.totalorder %s24, 0
      %p77 = por %p75, %p76
      %s78 = ssub.s32 %s18, %s25
      %p79 = scmp.eq.s32.totalorder %s78, 0
      %s81 = sadd.s32 %s80, 1
      %s82 = scalar_select %p79, %s80, %s81
      %p85 = pneg %p79
      %p86 = scmp.eq.s32.totalorder %s18, 1
      %p87 = por %p85, %p86
      %p88 = scmp.ne.s32.totalorder %s80, %s83
      %p89 = scmp.eq.s32.totalorder %s18, 0
      %p90 = por %p88, %p89
      %p91 = scmp.ne.s32.totalorder %s80, %s83
      %p92 = scmp.eq.s32.totalorder %s23, 1
      %p93 = por %p91, %p92
      %p94 = scmp.ne.s32.totalorder %s83, %s84
      %p95 = scmp.eq.s32.totalorder %s23, 0
      %p96 = por %p94, %p95
      %p97 = scmp.ne.s32.totalorder %s83, %s84
      %p98 = scmp.eq.s32.totalorder %s24, 1
      %p99 = por %p97, %p98
      %p101 = scmp.ne.s32.totalorder %s84, %s100
      %p102 = scmp.eq.s32.totalorder %s24, 0
      %p103 = por %p101, %p102
      %s104 = ssub.s32 %s18, %s25
      %p105 = scmp.eq.s32.totalorder %s104, 0
      %s107 = sadd.s32 %s106, 1
      %s108 = scalar_select %p105, %s106, %s107
      %p111 = pneg %p105
      %p112 = scmp.eq.s32.totalorder %s18, 1
      %p113 = por %p111, %p112
      %p114 = scmp.ne.s32.totalorder %s106, %s109
      %p115 = scmp.eq.s32.totalorder %s18, 0
      %p116 = por %p114, %p115
      %p117 = scmp.ne.s32.totalorder %s106, %s109
      %p118 = scmp.eq.s32.totalorder %s23, 1
      %p119 = por %p117, %p118
      %p120 = scmp.ne.s32.totalorder %s109, %s110
      %p121 = scmp.eq.s32.totalorder %s23, 0
      %p122 = por %p120, %p121
      %p123 = scmp.ne.s32.totalorder %s109, %s110
      %p124 = scmp.eq.s32.totalorder %s24, 1
      %p125 = por %p123, %p124
      %p127 = scmp.ne.s32.totalorder %s110, %s126
      %p128 = scmp.eq.s32.totalorder %s24, 0
      %p129 = por %p127, %p128
      %p130 = scmp.le.s32.totalorder 1, %s18
      %p131 = scmp.lt.s32.totalorder %s18, 3
      %p132 = pnand %p130, %p131
      %p133 = pneg %p132
      // Predicated region
      $region9: #{tpu_custom_call.1} parent=5 // pred_check
        _
      $region10: #{tpu_custom_call.1} parent=5 // pred_check_branch
        %135 = sbr.rel (%p132) target = $region12
      $region11: #{tpu_custom_call.1} parent=5 // pred_region
        %s136 = ssub.s32 %s18, 1
      $region12: #{tpu_custom_call.1} parent=5 // pred_fallthru
        _
      %p137 = scmp.lt.s32.totalorder %s18, 2
      // Predicated region
      $region13: #{tpu_custom_call.1} parent=5 // pred_check
        %p138 = pneg %p137
      $region14: #{tpu_custom_call.1} parent=5 // pred_check_branch
        %140 = sbr.rel (%p138) target = $region16
      $region15: #{tpu_custom_call.1} parent=5 // pred_region
        // Predicated region
        $region17: #{tpu_custom_call.1} parent=15 // pred_check
          %p141 = pneg %p38
        $region18: #{tpu_custom_call.1} parent=15 // pred_check_branch
          %143 = sbr.rel (%p141) target = $region20
        $region19: #{tpu_custom_call.1} parent=15 // pred_region
          %s144 = sand.u32 %s28, 1
          %s145 = scalar_lea.sflag [#allocation3], %s144
          %s146 = sand.u32 %s28, 1
          %s147 = smul.addr %s146, 16
          %s148 = scalar_lea.vmem [#allocation2], %s147
          %150 = vsyncadd %s145, 0
          %s151 = smul.addr %s18, 2
          %s152 = smul.addr %s151, 8
          %s153 = scalar_lea.hbm %s0, %s152
          %s155 = sshll.u32 %s153, 4
          %s156 = int_to_ptr.hbm [resolvable:$true] %s155
          %s157 = sshll.u32 %s148, 4
          %s158 = int_to_ptr.vmem [resolvable:$true] %s157
          %160 = dma.hbm_to_vmem [thread:$0]  %s156, 256, %s158, %s145
        $region20: #{tpu_custom_call.1} parent=15 // pred_fallthru
          _
        // Predicated region
        $region21: #{tpu_custom_call.1} parent=15 // pred_check
          %p161 = pneg %p64
        $region22: #{tpu_custom_call.1} parent=15 // pred_check_branch
          %163 = sbr.rel (%p161) target = $region24
        $region23: #{tpu_custom_call.1} parent=15 // pred_region
          %s164 = sand.u32 %s54, 1
          %s165 = scalar_lea.sflag [#allocation6], %s164
          %s166 = sand.u32 %s54, 1
          %s167 = smul.addr %s166, 16
          %s168 = scalar_lea.vmem [#allocation5], %s167
          %170 = vsyncadd %s165, 0
          %s171 = smul.addr %s18, 2
          %s172 = smul.addr %s171, 8
          %s173 = scalar_lea.hbm %s1, %s172
          %s175 = sshll.u32 %s173, 4
          %s176 = int_to_ptr.hbm [resolvable:$true] %s175
          %s177 = sshll.u32 %s168, 4
          %s178 = int_to_ptr.vmem [resolvable:$true] %s177
          %180 = dma.hbm_to_vmem [thread:$0]  %s176, 256, %s178, %s165
        $region24: #{tpu_custom_call.1} parent=15 // pred_fallthru
          _
        // Predicated region
        $region25: #{tpu_custom_call.1} parent=15 // pred_check
          %p181 = pneg %p90
        $region26: #{tpu_custom_call.1} parent=15 // pred_check_branch
          %183 = sbr.rel (%p181) target = $region28
        $region27: #{tpu_custom_call.1} parent=15 // pred_region
          %p184 = scmp.lt.s32.totalorder %s18, 1
          %s185 = scalar_select %p184, %s18, 1
          %s186 = smul.addr %s185, 8
          %s187 = scalar_lea.vmem %s2, %s186
        $region28: #{tpu_custom_call.1} parent=15 // pred_fallthru
          _
      $region16: #{tpu_custom_call.1} parent=5 // pred_fallthru
        _
      %p188 = scmp.le.s32.totalorder 1, %s18
      %p189 = scmp.lt.s32.totalorder %s18, 3
      %p190 = pnand %p188, %p189
      %p191 = pneg %p190
      // Predicated region
      $region29: #{tpu_custom_call.1} parent=5 // pred_check
        _
      $region30: #{tpu_custom_call.1} parent=5 // pred_check_branch
        %193 = sbr.rel (%p190) target = $region32
      $region31: #{tpu_custom_call.1} parent=5 // pred_region
        %s194 = ssub.s32 %s18, 1
        %s195 = sand.u32 %s31, 1
        %s196 = scalar_lea.sflag [#allocation3], %s195
        %s197 = sand.u32 %s31, 1
        %s198 = smul.addr %s197, 16
        %s199 = scalar_lea.vmem [#allocation2], %s198
        // Predicated region
        $region33: #{tpu_custom_call.1} parent=31 // pred_check
          %p200 = pneg %p44
        $region34: #{tpu_custom_call.1} parent=31 // pred_check_branch
          %202 = sbr.rel (%p200) target = $region36
        $region35: #{tpu_custom_call.1} parent=31 // pred_region
          %204 = dma.done %s196, 256
        $region36: #{tpu_custom_call.1} parent=31 // pred_fallthru
          _
        %s205 = sand.u32 %s57, 1
        %s206 = scalar_lea.sflag [#allocation6], %s205
        %s207 = sand.u32 %s57, 1
        %s208 = smul.addr %s207, 16
        %s209 = scalar_lea.vmem [#allocation5], %s208
        // Predicated region
        $region37: #{tpu_custom_call.1} parent=31 // pred_check
          %p210 = pneg %p70
        $region38: #{tpu_custom_call.1} parent=31 // pred_check_branch
          %212 = sbr.rel (%p210) target = $region40
        $region39: #{tpu_custom_call.1} parent=31 // pred_region
          %214 = dma.done %s206, 256
        $region40: #{tpu_custom_call.1} parent=31 // pred_fallthru
          _
        %s215 = sand.u32 %s31, 1
        %s216 = scalar_lea.sflag [#allocation3], %s215
        %s217 = sand.u32 %s31, 1
        %s218 = smul.addr %s217, 16
        %s219 = scalar_lea.vmem [#allocation2], %s218
        %p220 = pneg %p44
        %p221 = pneg %p41
        %s222 = sand.u32 %s57, 1
        %s223 = scalar_lea.sflag [#allocation6], %s222
        %s224 = sand.u32 %s57, 1
        %s225 = smul.addr %s224, 16
        %s226 = scalar_lea.vmem [#allocation5], %s225
        %p227 = pneg %p70
        %p228 = pneg %p67
        %p229 = scmp.lt.s32.totalorder %s23, 1
        %s230 = scalar_select %p229, %s23, 1
        %s231 = smul.addr %s230, 8
        %s232 = scalar_lea.vmem %s2, %s231
        %p233 = pneg %p96
        %p234 = pneg %p93
        %p235 = pneg %p122
        %p236 = pneg %p119
        %s237 = sand.u32 %s109, 1
        %s238 = scalar_lea.sflag [#allocation4], %s237
        %s239 = sand.u32 %s109, 1
        %s240 = smul.addr %s239, 8
        %s241 = scalar_lea.vmem [#allocation7], %s240
        %p242 = scmp.lt.s32.totalorder %s23, 1
        %s243 = scalar_select %p242, %s23, 1
        %s244 = smul.addr %s243, 8
        %s245 = scalar_lea.vmem %s2, %s244
        %v246 = vld [vmem:[%s199] sm:$0xff]
        %v247 = vld [vmem:[%s199 + $0x8] sm:$0xff]
        %v248 = vld [vmem:[%s209] sm:$0xff]
        %v249 = vld [vmem:[%s209 + $0x8] sm:$0xff]
        %v250 = vld [vmem:[%s245] sm:$0xff]
        %v251 = vadd.f32 %v246, %v247
        %252 = vadd.xlane.f32.xlu0 %v251
        %v253 = vpop.xlane.xlu0 %252
        %v254 = vmax.f32 %v248, %v249
        %255 = vmax.xlane.f32.xlu0 %v254
        %v256 = vpop.xlane.xlu0 %255
        %v257 = vsub.f32 %v248, %v256
        %v258 = vsub.f32 %v249, %v256
        %v259 = vmul.f32 %v257, 1.442695
        %v260 = vpow.pop %v259
        %v261 = vmul.f32 %v258, 1.442695
        %v262 = vpow.pop %v261
        %v263 = vadd.f32 %v260, %v262
        %264 = vadd.xlane.f32.xlu0 %v263
        %v265 = vpop.xlane.xlu0 %264
        %v266 = vlog2.pop %v265
        %v267 = vmul.f32 %v266, 0.6931472
        %v268 = vmax.f32 %v246, 1e-30
        %v269 = vmax.f32 %v247, 1e-30
        %v270 = vlog2.pop %v268
        %v271 = vmul.f32 %v270, 0.6931472
        %v272 = vlog2.pop %v269
        %v273 = vmul.f32 %v272, 0.6931472
        %v274 = vsub.f32 %v271, %v248
        %v275 = vsub.f32 %v273, %v249
        %v276 = vmul.f32 %v246, %v274
        %v277 = vmul.f32 %v247, %v275
        %v278 = vadd.f32 %v276, %v277
        %279 = vadd.xlane.f32.xlu0 %v278
        %v280 = vpop.xlane.xlu0 %279
        %vm281 = vcmp.gt.f32.partialorder %v253, 0.0
        %v282 = vsel %vm281, %v253, 1.0
        %v283 = vrcp.pop %v282
        %v284 = vmul.f32 %v282, %v283
        %v285 = vsub.f32 1.0, %v284
        %v286 = vmul.f32 %v283, %v285
        %v287 = vadd.f32 %v283, %v286
        %vm288 = vweird.f32 %v282
        %vm289 = vweird.f32 %v283
        %vm290 = vmor %vm288, %vm289
        %v291 = vsel %vm290, %v283, %v287
        %v292 = vand.u32 2147483647, %v282
        %vm293 = vcmp.eq.f32.partialorder %v292, 8.507059e+37
        %v294 = vand.u32 %v282, 2147483648
        %v295 = vor.u32 1.1754944e-38, %v294
        %v296 = vsel %vm293, %v295, %v291
        %v297 = vsel %vm281, %v296, 0.0
        %v298 = vmul.f32 %v280, %v297
        %v299 = vlog2.pop %v282
        %v300 = vmul.f32 %v299, 0.6931472
        %v301 = vsub.f32 %v298, %v300
        %v302 = vadd.f32 %v301, %v256
        %v303 = vadd.f32 %v302, %v267
        %v304 = vsel %vm281, %v303, 0.0
        %v305 = vadd.f32 %v253, 1.0
        %v306 = vlog2.pop %v305
        %v307 = vmul.f32 %v306, 0.6931472
        %v308 = vsub.f32 %v307, %v250
        %v309 = vmul.f32 %v308, %v308
        %v310 = vmul.f32 %v304, %v250
        %312 = vrot.lane.b32.xlu0 %v310, 127
        %v313 = vpop.permute.xlu0 %312
        %vm315 = vcmask 7168
        %v316 = vsel %vm315, %v313, 0.0
        %317 = vadd.xlane.f32.xlu0 %v316
        %v318 = vpop.xlane.xlu0 %317
        %v319 = vrot.slane %v318, 4
        %v320 = vadd.f32 %v318, %v319
        %v321 = vrot.slane %v320, 2
        %v322 = vadd.f32 %v320, %v321
        %v323 = vrot.slane %v322, 1
        %v324 = vadd.f32 %v322, %v323
        %s325 = vtos %v324
        %327 = vrot.lane.b32.xlu0 %v250, 127
        %v328 = vpop.permute.xlu0 %327
        %v330 = vmul.f32 %v309, %v328
        %v331 = vsel %vm315, %v330, 0.0
        %332 = vadd.xlane.f32.xlu0 %v331
        %v333 = vpop.xlane.xlu0 %332
        %v334 = vrot.slane %v333, 4
        %v335 = vadd.f32 %v333, %v334
        %v336 = vrot.slane %v335, 2
        %v337 = vadd.f32 %v335, %v336
        %v338 = vrot.slane %v337, 1
        %v339 = vadd.f32 %v337, %v338
        %s340 = vtos %v339
        %v341 = vlaneseq
        %v342 = vshrl.u32 %v341, 7
        %v343 = vlaneseq
        %v344 = vand.u32 %v343, 127
        %vm345 = vcmp.eq.s32.totalorder %v342, 0
        %vm346 = vcmp.eq.s32.totalorder %v344, 0
        %vm347 = vmand %vm345, %vm346
        %v348 = vstv %s325
        %v349 = vsel %vm347, %v348, 0.0
        %vm350 = vcmp.eq.s32.totalorder %v344, 1
        %vm351 = vmand %vm345, %vm350
        %v352 = vstv %s340
        %v353 = vsel %vm351, %v352, 0.0
        %v354 = vadd.f32 %v349, %v353
        %355 = vst [vmem:[%s241] sm:$0xff] %v354
        %s356 = sand.u32 %s109, 1
        %s357 = scalar_lea.sflag [#allocation4], %s356
        %s358 = sand.u32 %s109, 1
        %s359 = smul.addr %s358, 8
        %s360 = scalar_lea.vmem [#allocation7], %s359
        // Predicated region
        $region41: #{tpu_custom_call.1} parent=31 // pred_check
          %p361 = pneg %p119
        $region42: #{tpu_custom_call.1} parent=31 // pred_check_branch
          %363 = sbr.rel (%p361) target = $region44
        $region43: #{tpu_custom_call.1} parent=31 // pred_region
          %365 = vsyncadd %s357, 0
          %s366 = smul.addr %s23, 8
          %s367 = scalar_lea.hbm %s3, %s366
          %s369 = sshll.u32 %s360, 4
          %s370 = int_to_ptr.vmem [resolvable:$true] %s369
          %s371 = sshll.u32 %s367, 4
          %s372 = int_to_ptr.hbm [resolvable:$true] %s371
          %374 = dma.vmem_to_hbm [thread:$0]  %s370, 128, %s372, %s357
        $region44: #{tpu_custom_call.1} parent=31 // pred_fallthru
          _
      $region32: #{tpu_custom_call.1} parent=5 // pred_fallthru
        _
      %p375 = scmp.le.s32.totalorder 2, %s18
      // Predicated region
      $region45: #{tpu_custom_call.1} parent=5 // pred_check
        %p376 = pneg %p375
      $region46: #{tpu_custom_call.1} parent=5 // pred_check_branch
        %378 = sbr.rel (%p376) target = $region48
      $region47: #{tpu_custom_call.1} parent=5 // pred_region
        %s379 = ssub.s32 %s18, 2
        // Predicated region
        $region49: #{tpu_custom_call.1} parent=47 // pred_check
          %p380 = pneg %p125
        $region50: #{tpu_custom_call.1} parent=47 // pred_check_branch
          %382 = sbr.rel (%p380) target = $region52
        $region51: #{tpu_custom_call.1} parent=47 // pred_region
          %s383 = sand.u32 %s110, 1
          %s384 = scalar_lea.sflag [#allocation4], %s383
          %s385 = sand.u32 %s110, 1
          %s386 = smul.addr %s385, 8
          %s387 = scalar_lea.vmem [#allocation7], %s386
          %389 = dma.done %s384, 128
        $region52: #{tpu_custom_call.1} parent=47 // pred_fallthru
          _
      $region48: #{tpu_custom_call.1} parent=5 // pred_fallthru
        _
    $region6: #{tpu_custom_call.1} parent=1 // loop_footer
      %s22 = sadd.s32 1, %s18
    $region7: #{tpu_custom_call.1} parent=1 // loop_footer_branch
      %17 = sbr.rel target = $region3
    $region8: #{tpu_custom_call.1} parent=1 // loop_exit
      _
    %390 = vsyncpa [#allocation3], 1
    %s391 = scalar_lea.sflag [#allocation3], 1
    %392 = vsyncpa %s391, 1
    %393 = vsyncpa [#allocation6], 1
    %s394 = scalar_lea.sflag [#allocation6], 1
    %395 = vsyncpa %s394, 1
    %396 = vsyncpa [#allocation4], 1
    %s397 = scalar_lea.sflag [#allocation4], 1
    %398 = vsyncpa %s397, 1

</llo_original>
